<compile_context>
chip_gen: v7x
topology: tpu7x:2x2x1
jax: 0.10.0
libtpu: 0.0.40
codegen_flags: <defaults>
</compile_context>

<pallas_src>
import jax
import jax.numpy as jnp
from jax import lax
from jax.experimental import pallas as pl
from jax.experimental.pallas import tpu as pltpu

_LANES = 128
_SUBLANES = 8
_MAX_BLOCK_ROWS = 2048  # 2048 * 128 * 4B = 1 MiB per f32 stream per buffer


def _cdiv(a, b):
    return -(-a // b)


def _round_up(a, b):
    return _cdiv(a, b) * b


def _make_kernel(n, block_rows, blocks_per_split, has_weight, needs_mask):
    def kernel(*refs):
        if has_weight:
            x_ref, t_ref, w_ref, out_ref, acc_ref = refs
        else:
            x_ref, t_ref, out_ref, acc_ref = refs
            w_ref = None

        j = pl.program_id(1)

        @pl.when(j == 0)
        def _init():
            acc_ref[...] = jnp.zeros_like(acc_ref)

        x = x_ref[...].astype(jnp.float32)
        t = t_ref[...].astype(jnp.float32)

        # Numerically-stable BCE-with-logits; reuse e = exp(-|x|) for sigmoid.
        e = jnp.exp(-jnp.abs(x))
        bce = jnp.maximum(x, 0.0) - x * t + jnp.log1p(e)
        p = jnp.where(x >= 0.0, 1.0, e) / (1.0 + e)  # sigmoid(x), one exp total

        if has_weight:
            bce = bce * w_ref[...].astype(jnp.float32)

        if needs_mask:
            # Global flat element index of every tile element; zero everything
            # past the true element count (covers zero-padding, ragged blocks
            # and duplicated clamped blocks -- jnp.where selects, so stale VMEM
            # garbage in clipped regions cannot propagate NaN/Inf).
            blk = pl.program_id(0) * blocks_per_split + j
            base = blk * (block_rows * _LANES)
            idx = (base
                   + lax.broadcasted_iota(jnp.int32, (block_rows, _LANES), 0) * _LANES
                   + lax.broadcasted_iota(jnp.int32, (block_rows, _LANES), 1))
            valid = idx < n
            bce = jnp.where(valid, bce, 0.0)
            p = jnp.where(valid, p, 0.0)
            t = jnp.where(valid, t, 0.0)

        def fold(v):  # (block_rows, 128) -> (8, 128) partial sums (VPU-only adds)
            return v.reshape(block_rows // _SUBLANES, _SUBLANES, _LANES).sum(axis=0)

        acc_ref[0] += fold(bce)      # sum of (weighted) BCE terms
        acc_ref[1] += fold(p * t)    # intersection
        acc_ref[2] += fold(p)        # sum sigmoid(inputs)
        acc_ref[3] += fold(t)        # sum targets

        @pl.when(j == pl.num_programs(1) - 1)
        def _finalize():
            out_ref[...] = acc_ref[...]

    return kernel


def dice_bce_loss(inputs, targets, weight=None, smooth=1.0):
    # Mirror the PyTorch module's shape plumbing.
    if inputs.ndim == 3 and inputs.shape[1] == 1:
        inputs = jnp.squeeze(inputs, axis=1)
    if targets.shape != inputs.shape:
        targets = jnp.reshape(targets, inputs.shape)
    if not jnp.issubdtype(targets.dtype, jnp.floating):
        targets = targets.astype(jnp.float32)

    x = jnp.ravel(inputs)   # keep native dtype; cast inside the kernel
    t = jnp.ravel(targets)
    n = x.shape[0]

    has_weight = weight is not None
    operands = [x, t]
    if has_weight:
        w = jnp.asarray(weight)
        if not jnp.issubdtype(w.dtype, jnp.floating):
            w = w.astype(jnp.float32)
        # PyTorch broadcasts `weight` against the (un-flattened) input shape.
        w = jnp.ravel(jnp.broadcast_to(w, inputs.shape))
        operands.append(w)

    # Pad only up to the next (8, 128) row group (no-op for typical sizes).
    chunk = _SUBLANES * _LANES
    padded = _round_up(n, chunk)
    if padded != n:
        operands = [jnp.pad(v, (0, padded - n)) for v in operands]
    rows = padded // _LANES                      # multiple of 8
    operands = [v.reshape(rows, _LANES) for v in operands]

    block_rows = min(rows, _MAX_BLOCK_ROWS)      # multiple of 8 (or == rows)
    total_blocks = _cdiv(rows, block_rows)
    nsplit = 2 if total_blocks >= 2 else 1       # feed both TCs on megacore chips
    bpc = _cdiv(total_blocks, nsplit)            # row-blocks per split
    covered = nsplit * bpc * block_rows * _LANES
    needs_mask = covered != n

    def in_map(i, j):
        # Clamp so duplicated / overhanging blocks never issue an OOB DMA; the
        # in-kernel mask zeroes their contribution.
        return (jnp.minimum(i * bpc + j, total_blocks - 1), 0)

    tile_spec = pl.BlockSpec((block_rows, _LANES), in_map)
    in_specs = [tile_spec] * len(operands)

    out = pl.pallas_call(
        _make_kernel(n, block_rows, bpc, has_weight, needs_mask),
        out_shape=jax.ShapeDtypeStruct((nsplit, 4, _SUBLANES, _LANES), jnp.float32),
        grid_spec=pltpu.PrefetchScalarGridSpec(
            num_scalar_prefetch=0,
            grid=(nsplit, bpc),
            in_specs=in_specs,
            out_specs=pl.BlockSpec((None, 4, _SUBLANES, _LANES),
                                   lambda i, j: (i, 0, 0, 0)),
            scratch_shapes=[pltpu.VMEM((4, _SUBLANES, _LANES), jnp.float32)],
        ),
        compiler_params=pltpu.CompilerParams(
            dimension_semantics=("parallel", "arbitrary")),
    )(*operands)

    # Tiny scalar epilogue in plain JAX (also keeps `smooth` out of the kernel).
    sums = jnp.sum(out, axis=(0, 2, 3))          # (4,)
    bce_mean = sums[0] / jnp.float32(n)
    dice = 1.0 - (2.0 * sums[1] + smooth) / (sums[2] + sums[3] + smooth)
    return bce_mean + dice


def _reference(inputs, targets, weight=None, smooth=1.0):
    x = jnp.ravel(inputs).astype(jnp.float32)
    t = jnp.ravel(targets).astype(jnp.float32)
    bce = jnp.maximum(x, 0.0) - x * t + jnp.log1p(jnp.exp(-jnp.abs(x)))
    if weight is not None:
        bce = bce * jnp.ravel(jnp.broadcast_to(weight, inputs.shape)).astype(jnp.float32)
    bce = jnp.mean(bce)
    p = jax.nn.sigmoid(x)
    inter = jnp.sum(p * t)
    dice = 1.0 - (2.0 * inter + smooth) / (jnp.sum(p) + jnp.sum(t) + smooth)
    return bce + dice


if __name__ == "__main__":
    key = jax.random.PRNGKey(0)
    k1, k2 = jax.random.split(key)

    # NCHW logits and binary targets (module has no learnable parameters).
    inputs = jax.random.normal(k1, (2, 4, 16, 16), dtype=jnp.float32)
    targets = (jax.random.uniform(k2, (2, 4, 16, 16)) < 0.5).astype(jnp.float32)

    loss = jax.block_until_ready(dice_bce_loss(inputs, targets, weight=None, smooth=1.0))
    ref = _reference(inputs, targets, smooth=1.0)
    assert jnp.allclose(loss, ref, rtol=1e-4, atol=1e-4), (loss, ref)

    # Also exercise the weighted + ragged (non-multiple-of-1024) masked path.
    k3, k4, k5 = jax.random.split(k1, 3)
    x2 = jax.random.normal(k3, (3, 1, 7, 11), dtype=jnp.float32)          # 231 elems
    t2 = (jax.random.uniform(k4, (3, 1, 7, 11)) < 0.5).astype(jnp.float32)
    w2 = jax.random.uniform(k5, (1, 7, 11)) + 0.5                          # broadcasts
    loss2 = jax.block_until_ready(dice_bce_loss(x2, t2, weight=w2, smooth=1.0))
    ref2 = _reference(x2, t2, weight=w2, smooth=1.0)
    assert jnp.allclose(loss2, ref2, rtol=1e-4, atol=1e-4), (loss2, ref2)

    print("KERNEL_OK")
</pallas_src>

<mosaic_0001>
module attributes {stable_mosaic.version = 11 : i64} {
  func.func @kernel(%arg0: i32, %arg1: i32, %arg2: memref<16x128xf32, #tpu.memory_space<vmem>>, %arg3: memref<16x128xf32, #tpu.memory_space<vmem>>, %arg4: memref<1x4x8x128xf32, #tpu.memory_space<vmem>>, %arg5: memref<4x8x128xf32, #tpu.memory_space<vmem>>) attributes {dimension_semantics = [#tpu.dimension_semantics<parallel>, #tpu.dimension_semantics<arbitrary>], iteration_bounds = array<i64: 1, 1>, scalar_prefetch = 0 : i64, scratch_operands = 1 : i64, tpu.core_type = #tpu.core_type<tc>, window_params = [{transform_indices = @transform_0, window_bounds = array<i64: 16, 128>}, {transform_indices = @transform_1, window_bounds = array<i64: 16, 128>}, {transform_indices = @transform_2, window_bounds = array<i64: 1, 4, 8, 128>}]} {
    %c0_i32 = arith.constant 0 : i32
    %0 = arith.cmpi eq, %arg1, %c0_i32 : i32
    %1 = arith.extui %0 : i1 to i32
    %c0_i32_0 = arith.constant 0 : i32
    %2 = arith.cmpi ne, %1, %c0_i32_0 : i32
    scf.if %2 {
      %cst_35 = arith.constant 0.000000e+00 : f32
      %58 = vector.broadcast %cst_35 : f32 to vector<4x8x128xf32>
      %c0_36 = arith.constant 0 : index
      %c0_37 = arith.constant 0 : index
      %c0_38 = arith.constant 0 : index
      %59 = vector.load %arg5[%c0_36, %c0_37, %c0_38] : memref<4x8x128xf32, #tpu.memory_space<vmem>>, vector<4x8x128xf32>
      tpu.vector_store %arg5[%c0_36, %c0_37, %c0_38], %58 {strides = array<i32>} : memref<4x8x128xf32, #tpu.memory_space<vmem>>, vector<4x8x128xf32>,
    } else {
    }
    %c0 = arith.constant 0 : index
    %c0_1 = arith.constant 0 : index
    %3 = vector.load %arg2[%c0, %c0_1] : memref<16x128xf32, #tpu.memory_space<vmem>>, vector<16x128xf32>
    %c0_2 = arith.constant 0 : index
    %c0_3 = arith.constant 0 : index
    %4 = vector.load %arg3[%c0_2, %c0_3] : memref<16x128xf32, #tpu.memory_space<vmem>>, vector<16x128xf32>
    %5 = math.absf %3 : vector<16x128xf32>
    %cst = arith.constant 0.000000e+00 : f32
    %6 = vector.broadcast %cst : f32 to vector<16x128xf32>
    %7 = arith.subf %6, %5 : vector<16x128xf32>
    %8 = math.exp %7 : vector<16x128xf32>
    %cst_4 = arith.constant 0.000000e+00 : f32
    %9 = vector.broadcast %cst_4 : f32 to vector<16x128xf32>
    %10 = arith.maximumf %3, %9 : vector<16x128xf32>
    %11 = arith.mulf %3, %4 : vector<16x128xf32>
    %12 = arith.subf %10, %11 : vector<16x128xf32>
    %13 = math.log1p %8 : vector<16x128xf32>
    %14 = arith.addf %12, %13 : vector<16x128xf32>
    %cst_5 = arith.constant 0.000000e+00 : f32
    %15 = vector.broadcast %cst_5 : f32 to vector<16x128xf32>
    %16 = arith.cmpf oge, %3, %15 : vector<16x128xf32>
    %cst_6 = arith.constant 1.000000e+00 : f32
    %17 = vector.broadcast %cst_6 : f32 to vector<16x128xf32>
    %18 = arith.select %16, %17, %8 : vector<16x128xi1>, vector<16x128xf32>
    %cst_7 = arith.constant 1.000000e+00 : f32
    %19 = vector.broadcast %cst_7 : f32 to vector<16x128xf32>
    %20 = arith.addf %19, %8 : vector<16x128xf32>
    %21 = arith.divf %18, %20 : vector<16x128xf32>
    %c0_8 = arith.constant 0 : index
    %c0_9 = arith.constant 0 : index
    %c0_10 = arith.constant 0 : index
    %22 = vector.load %arg5[%c0_8, %c0_9, %c0_10] : memref<4x8x128xf32, #tpu.memory_space<vmem>>, vector<1x8x128xf32>
    %23 = vector.shape_cast %22 : vector<1x8x128xf32> to vector<8x128xf32>
    %24 = vector.shape_cast %14 : vector<16x128xf32> to vector<2x8x128xf32>
    %cst_11 = arith.constant dense<0.000000e+00> : vector<8x128xf32>
    %25 = vector.multi_reduction <add>, %24, %cst_11 [0] : vector<2x8x128xf32> to vector<8x128xf32>
    %26 = arith.addf %23, %25 : vector<8x128xf32>
    %c0_12 = arith.constant 0 : index
    %c0_13 = arith.constant 0 : index
    %c0_14 = arith.constant 0 : index
    %27 = vector.load %arg5[%c0_12, %c0_13, %c0_14] : memref<4x8x128xf32, #tpu.memory_space<vmem>>, vector<1x8x128xf32>
    %28 = vector.shape_cast %27 : vector<1x8x128xf32> to vector<8x128xf32>
    %29 = vector.shape_cast %26 : vector<8x128xf32> to vector<1x8x128xf32>
    tpu.vector_store %arg5[%c0_12, %c0_13, %c0_14], %29 {strides = array<i32>} : memref<4x8x128xf32, #tpu.memory_space<vmem>>, vector<1x8x128xf32>,
    %c1 = arith.constant 1 : index
    %c0_15 = arith.constant 0 : index
    %c0_16 = arith.constant 0 : index
    %30 = vector.load %arg5[%c1, %c0_15, %c0_16] : memref<4x8x128xf32, #tpu.memory_space<vmem>>, vector<1x8x128xf32>
    %31 = vector.shape_cast %30 : vector<1x8x128xf32> to vector<8x128xf32>
    %32 = arith.mulf %21, %4 : vector<16x128xf32>
    %33 = vector.shape_cast %32 : vector<16x128xf32> to vector<2x8x128xf32>
    %cst_17 = arith.constant dense<0.000000e+00> : vector<8x128xf32>
    %34 = vector.multi_reduction <add>, %33, %cst_17 [0] : vector<2x8x128xf32> to vector<8x128xf32>
    %35 = arith.addf %31, %34 : vector<8x128xf32>
    %c1_18 = arith.constant 1 : index
    %c0_19 = arith.constant 0 : index
    %c0_20 = arith.constant 0 : index
    %36 = vector.load %arg5[%c1_18, %c0_19, %c0_20] : memref<4x8x128xf32, #tpu.memory_space<vmem>>, vector<1x8x128xf32>
    %37 = vector.shape_cast %36 : vector<1x8x128xf32> to vector<8x128xf32>
    %38 = vector.shape_cast %35 : vector<8x128xf32> to vector<1x8x128xf32>
    tpu.vector_store %arg5[%c1_18, %c0_19, %c0_20], %38 {strides = array<i32>} : memref<4x8x128xf32, #tpu.memory_space<vmem>>, vector<1x8x128xf32>,
    %c2 = arith.constant 2 : index
    %c0_21 = arith.constant 0 : index
    %c0_22 = arith.constant 0 : index
    %39 = vector.load %arg5[%c2, %c0_21, %c0_22] : memref<4x8x128xf32, #tpu.memory_space<vmem>>, vector<1x8x128xf32>
    %40 = vector.shape_cast %39 : vector<1x8x128xf32> to vector<8x128xf32>
    %41 = vector.shape_cast %21 : vector<16x128xf32> to vector<2x8x128xf32>
    %cst_23 = arith.constant dense<0.000000e+00> : vector<8x128xf32>
    %42 = vector.multi_reduction <add>, %41, %cst_23 [0] : vector<2x8x128xf32> to vector<8x128xf32>
    %43 = arith.addf %40, %42 : vector<8x128xf32>
    %c2_24 = arith.constant 2 : index
    %c0_25 = arith.constant 0 : index
    %c0_26 = arith.constant 0 : index
    %44 = vector.load %arg5[%c2_24, %c0_25, %c0_26] : memref<4x8x128xf32, #tpu.memory_space<vmem>>, vector<1x8x128xf32>
    %45 = vector.shape_cast %44 : vector<1x8x128xf32> to vector<8x128xf32>
    %46 = vector.shape_cast %43 : vector<8x128xf32> to vector<1x8x128xf32>
    tpu.vector_store %arg5[%c2_24, %c0_25, %c0_26], %46 {strides = array<i32>} : memref<4x8x128xf32, #tpu.memory_space<vmem>>, vector<1x8x128xf32>,
    %c3 = arith.constant 3 : index
    %c0_27 = arith.constant 0 : index
    %c0_28 = arith.constant 0 : index
    %47 = vector.load %arg5[%c3, %c0_27, %c0_28] : memref<4x8x128xf32, #tpu.memory_space<vmem>>, vector<1x8x128xf32>
    %48 = vector.shape_cast %47 : vector<1x8x128xf32> to vector<8x128xf32>
    %49 = vector.shape_cast %4 : vector<16x128xf32> to vector<2x8x128xf32>
    %cst_29 = arith.constant dense<0.000000e+00> : vector<8x128xf32>
    %50 = vector.multi_reduction <add>, %49, %cst_29 [0] : vector<2x8x128xf32> to vector<8x128xf32>
    %51 = arith.addf %48, %50 : vector<8x128xf32>
    %c3_30 = arith.constant 3 : index
    %c0_31 = arith.constant 0 : index
    %c0_32 = arith.constant 0 : index
    %52 = vector.load %arg5[%c3_30, %c0_31, %c0_32] : memref<4x8x128xf32, #tpu.memory_space<vmem>>, vector<1x8x128xf32>
    %53 = vector.shape_cast %52 : vector<1x8x128xf32> to vector<8x128xf32>
    %54 = vector.shape_cast %51 : vector<8x128xf32> to vector<1x8x128xf32>
    tpu.vector_store %arg5[%c3_30, %c0_31, %c0_32], %54 {strides = array<i32>} : memref<4x8x128xf32, #tpu.memory_space<vmem>>, vector<1x8x128xf32>,
    %c0_i32_33 = arith.constant 0 : i32
    %55 = arith.cmpi eq, %arg1, %c0_i32_33 : i32
    %56 = arith.extui %55 : i1 to i32
    %c0_i32_34 = arith.constant 0 : i32
    %57 = arith.cmpi ne, %56, %c0_i32_34 : i32
    scf.if %57 {
      %c0_35 = arith.constant 0 : index
      %c0_36 = arith.constant 0 : index
      %c0_37 = arith.constant 0 : index
      %58 = vector.load %arg5[%c0_35, %c0_36, %c0_37] : memref<4x8x128xf32, #tpu.memory_space<vmem>>, vector<4x8x128xf32>
      %c0_38 = arith.constant 0 : index
      %c0_39 = arith.constant 0 : index
      %c0_40 = arith.constant 0 : index
      %c0_41 = arith.constant 0 : index
      %59 = vector.load %arg4[%c0_38, %c0_39, %c0_40, %c0_41] : memref<1x4x8x128xf32, #tpu.memory_space<vmem>>, vector<1x4x8x128xf32>
      %60 = vector.shape_cast %59 : vector<1x4x8x128xf32> to vector<4x8x128xf32>
      %61 = vector.shape_cast %58 : vector<4x8x128xf32> to vector<1x4x8x128xf32>
      tpu.vector_store %arg4[%c0_38, %c0_39, %c0_40, %c0_41], %61 {strides = array<i32>} : memref<1x4x8x128xf32, #tpu.memory_space<vmem>>, vector<1x4x8x128xf32>,
    } else {
    }
    return
  }
  func.func @transform_0(%arg0: i32, %arg1: i32) -> (i32, i32) {
    %c1_i32 = arith.constant 1 : i32
    %0 = arith.muli %arg0, %c1_i32 : i32
    %1 = arith.addi %0, %arg1 : i32
    %c0_i32 = arith.constant 0 : i32
    %2 = arith.minsi %1, %c0_i32 : i32
    %c0_i32_0 = arith.constant 0 : i32
    %c0_i32_1 = arith.constant 0 : i32
    return %2, %c0_i32_0 : i32, i32
  }
  func.func @transform_1(%arg0: i32, %arg1: i32) -> (i32, i32) {
    %c1_i32 = arith.constant 1 : i32
    %0 = arith.muli %arg0, %c1_i32 : i32
    %1 = arith.addi %0, %arg1 : i32
    %c0_i32 = arith.constant 0 : i32
    %2 = arith.minsi %1, %c0_i32 : i32
    %c0_i32_0 = arith.constant 0 : i32
    %c0_i32_1 = arith.constant 0 : i32
    return %2, %c0_i32_0 : i32, i32
  }
  func.func @transform_2(%arg0: i32, %arg1: i32) -> (i32, i32, i32, i32) {
    %c0_i32 = arith.constant 0 : i32
    %c0_i32_0 = arith.constant 0 : i32
    %c0_i32_1 = arith.constant 0 : i32
    %c0_i32_2 = arith.constant 0 : i32
    return %arg0, %c0_i32, %c0_i32_0, %c0_i32_1 : i32, i32, i32, i32
  }
}

</mosaic_0001>

<llo_original>
// kernel: tpu_custom_call.1
$region0: #{tpu_custom_call.1}
  #allocation0 [shape = 'u32[]', space=smem, size = 0x4, offset = 0x4, fixed_abs, tag = 'smem constant byte address 0x4 - core index']
  #allocation1 [shape = 'u32[144,128]{1,0:T(1,128)}', space=vmem, size = 0x12000, scoped, tag = 'internal scratch']
  #allocation2 [shape = 'f32[4,8,128]{2,1,0:T(8,128)}', space=vmem, size = 0x4000, scoped, tag = 'scratch operand']
  %s0 = inlined_call_operand.hbm [shape: f32[16,128], index: 0, kind: input, shape index: {}]
  %s1 = inlined_call_operand.hbm [shape: f32[16,128], index: 1, kind: input, shape index: {}]
  %s2 = inlined_call_operand.hbm [shape: f32[1,4,8,128], index: 2, kind: output, shape index: {}]
  %s3 = sld [smem:[#allocation0]]
  $region34: #{tpu_custom_call.1} parent=0
    _
  %s5 = ssub.s32 1, %s3
  %s6 = scalar_select 0, %s5, %s3
  $region1: #{tpu_custom_call.1} parent=0
    #allocation3 [shape = 'u8[8192]{0}', space=vmem, size = 0x2000, scoped, tag = 'input window, operand 0, single buffered']
    #allocation4 [shape = 's32[1]{0}', space=sflag, size = 0x4, scoped, tag = 'scoped memory for tpu_custom_call.1']
    #allocation5 [shape = 's32[1]{0}', space=sflag, size = 0x4, scoped, tag = 'scoped memory for tpu_custom_call.1']
    #allocation6 [shape = 'u8[8192]{0}', space=vmem, size = 0x2000, scoped, tag = 'input window, operand 1, single buffered']
    #allocation7 [shape = 's32[1]{0}', space=sflag, size = 0x4, scoped, tag = 'scoped memory for tpu_custom_call.1']
    #allocation8 [shape = 'u8[16384]{0}', space=vmem, size = 0x4000, scoped, tag = 'output window, operand 0, single buffered']
    %7 = vsyncpa [#allocation4], 0
    %8 = vsyncpa [#allocation7], 0
    %9 = vsyncpa [#allocation5], 0
    // Predicated region
    $region2: #{tpu_custom_call.1} parent=1 // pred_check
      _
    $region3: #{tpu_custom_call.1} parent=1 // pred_check_branch
      %11 = sbr.rel (0) target = $region5
    $region4: #{tpu_custom_call.1} parent=1 // pred_region
      %s12 = sadd.s32 0, 0
      %p13 = scmp.lt.s32.totalorder %s12, 0
      %s14 = scalar_select %p13, %s12, 0
      %s15 = smul.u32 2, %s14
      %s17 = ssub.s32 256, 256
      %18 = vsyncadd [#allocation4], %s17
      %s19 = smul.addr %s15, 128
      %s20 = scalar_lea.hbm %s0, %s19
      %s21 = sshll.u32 [#allocation3], 4
      %s22 = int_to_ptr.vmem [resolvable:$true] %s21
      %27 = dma.hbm_to_vmem [thread:$0]  %s20, 256, %s22, [#allocation4], 128, 128, 8
    $region5: #{tpu_custom_call.1} parent=1 // pred_fallthru
      _
    // Predicated region
    $region6: #{tpu_custom_call.1} parent=1 // pred_check
      _
    $region7: #{tpu_custom_call.1} parent=1 // pred_check_branch
      %29 = sbr.rel (0) target = $region9
    $region8: #{tpu_custom_call.1} parent=1 // pred_region
      %s30 = sadd.s32 0, 0
      %p31 = scmp.lt.s32.totalorder %s30, 0
      %s32 = scalar_select %p31, %s30, 0
      %s33 = smul.u32 2, %s32
      %s35 = ssub.s32 256, 256
      %36 = vsyncadd [#allocation7], %s35
      %s37 = smul.addr %s33, 128
      %s38 = scalar_lea.hbm %s1, %s37
      %s39 = sshll.u32 [#allocation6], 4
      %s40 = int_to_ptr.vmem [resolvable:$true] %s39
      %45 = dma.hbm_to_vmem [thread:$0]  %s38, 256, %s40, [#allocation7], 128, 128, 8
    $region9: #{tpu_custom_call.1} parent=1 // pred_fallthru
      _
    // Predicated region
    $region10: #{tpu_custom_call.1} parent=1 // pred_check
      _
    $region11: #{tpu_custom_call.1} parent=1 // pred_check_branch
      %47 = sbr.rel (0) target = $region13
    $region12: #{tpu_custom_call.1} parent=1 // pred_region
      %48 = dma.done [#allocation4], 256
    $region13: #{tpu_custom_call.1} parent=1 // pred_fallthru
      _
    // Predicated region
    $region14: #{tpu_custom_call.1} parent=1 // pred_check
      _
    $region15: #{tpu_custom_call.1} parent=1 // pred_check_branch
      %50 = sbr.rel (0) target = $region17
    $region16: #{tpu_custom_call.1} parent=1 // pred_region
      %51 = dma.done [#allocation7], 256
    $region17: #{tpu_custom_call.1} parent=1 // pred_fallthru
      _
    %s52 = sadd.s32 0, 0
    %p53 = scmp.lt.s32.totalorder %s52, 0
    %s54 = scalar_select %p53, %s52, 0
    %s55 = smul.u32 2, %s54
    %s56 = sadd.s32 0, 0
    %p57 = scmp.lt.s32.totalorder %s56, 0
    %s58 = scalar_select %p57, %s56, 0
    %s59 = smul.u32 2, %s58
    %p60 = scmp.eq.s32.totalorder 0, 0
    // Predicated region
    $region18: #{tpu_custom_call.1} parent=1 // pred_check
      %p61 = pneg %p60
    $region19: #{tpu_custom_call.1} parent=1 // pred_check_branch
      %63 = sbr.rel (%p61) target = $region21
    $region20: #{tpu_custom_call.1} parent=1 // pred_region
      %64 = vst [vmem:[#allocation2] sm:$0xff] 0.0
      %65 = vst [vmem:[#allocation2 + $0x8] sm:$0xff] 0.0
      %66 = vst [vmem:[#allocation2 + $0x10] sm:$0xff] 0.0
      %67 = vst [vmem:[#allocation2 + $0x18] sm:$0xff] 0.0
    $region21: #{tpu_custom_call.1} parent=1 // pred_fallthru
      _
    %v68 = vld [vmem:[#allocation3] sm:$0xff]
    %v69 = vld [vmem:[#allocation3 + $0x8] sm:$0xff]
    %v70 = vld [vmem:[#allocation6] sm:$0xff]
    %v71 = vld [vmem:[#allocation6 + $0x8] sm:$0xff]
    %v72 = vand.u32 2147483647, %v68
    %v73 = vand.u32 2147483647, %v69
    %v74 = vsub.f32 0.0, %v72
    %v75 = vsub.f32 0.0, %v73
    %v76 = vmul.f32 %v74, 1.442695
    %v77 = vpow.pop %v76
    %v78 = vmul.f32 %v75, 1.442695
    %v79 = vpow.pop %v78
    %v80 = vmax.f32 %v68, 0.0
    %v81 = vmax.f32 %v69, 0.0
    %v82 = vmul.f32 %v68, %v70
    %v83 = vmul.f32 %v69, %v71
    %v84 = vsub.f32 %v80, %v82
    %v85 = vsub.f32 %v81, %v83
    %v86 = vadd.f32 %v77, 1.0
    %v87 = vlog2.pop %v86
    %v88 = vmul.f32 %v87, 0.6931472
    %v89 = vmul.f32 -0.5, %v77
    %v90 = vadd.f32 %v89, 1.0
    %v91 = vmul.f32 %v90, %v77
    %v92 = vand.u32 2147483647, %v77
    %vm93 = vcmp.lt.f32.partialorder %v92, 0.0004427343
    %v94 = vsel %vm93, %v91, %v88
    %v95 = vadd.f32 %v79, 1.0
    %v96 = vlog2.pop %v95
    %v97 = vmul.f32 %v96, 0.6931472
    %v98 = vmul.f32 -0.5, %v79
    %v99 = vadd.f32 %v98, 1.0
    %v100 = vmul.f32 %v99, %v79
    %v101 = vand.u32 2147483647, %v79
    %vm102 = vcmp.lt.f32.partialorder %v101, 0.0004427343
    %v103 = vsel %vm102, %v100, %v97
    %v104 = vadd.f32 %v84, %v94
    %v105 = vadd.f32 %v85, %v103
    %vm106 = vcmp.ge.f32.partialorder %v68, 0.0
    %vm107 = vcmp.ge.f32.partialorder %v69, 0.0
    %v108 = vsel %vm106, 1.0, %v77
    %v109 = vsel %vm107, 1.0, %v79
    %v110 = vadd.f32 %v77, 1.0
    %v111 = vadd.f32 %v79, 1.0
    %v112 = vrcp.pop %v110
    %v113 = vmul.f32 %v108, %v112
    %v114 = vrcp.pop %v111
    %v115 = vmul.f32 %v109, %v114
    %v116 = vld [vmem:[#allocation2] sm:$0xff]
    %v117 = vadd.f32 %v104, %v105
    %v118 = vadd.f32 %v116, %v117
    %119 = vst [vmem:[#allocation2] sm:$0xff] %v118
    %s120 = scalar_lea.vmem [#allocation2], 8
    %v121 = vld [vmem:[%s120] sm:$0xff]
    %v122 = vmul.f32 %v113, %v70
    %v123 = vmul.f32 %v115, %v71
    %v124 = vadd.f32 %v122, %v123
    %v125 = vadd.f32 %v121, %v124
    %126 = vst [vmem:[%s120] sm:$0xff] %v125
    %s127 = scalar_lea.vmem [#allocation2], 16
    %v128 = vld [vmem:[%s127] sm:$0xff]
    %v129 = vadd.f32 %v113, %v115
    %v130 = vadd.f32 %v128, %v129
    %131 = vst [vmem:[%s127] sm:$0xff] %v130
    %s132 = scalar_lea.vmem [#allocation2], 24
    %v133 = vld [vmem:[%s132] sm:$0xff]
    %v134 = vadd.f32 %v70, %v71
    %v135 = vadd.f32 %v133, %v134
    %136 = vst [vmem:[%s132] sm:$0xff] %v135
    // Predicated region
    $region22: #{tpu_custom_call.1} parent=1 // pred_check
      %p137 = pneg %p60
    $region23: #{tpu_custom_call.1} parent=1 // pred_check_branch
      %139 = sbr.rel (%p137) target = $region25
    $region24: #{tpu_custom_call.1} parent=1 // pred_region
      %v140 = vld [vmem:[#allocation2] sm:$0xff]
      %v141 = vld [vmem:[#allocation2 + $0x8] sm:$0xff]
      %v142 = vld [vmem:[#allocation2 + $0x10] sm:$0xff]
      %v143 = vld [vmem:[#allocation2 + $0x18] sm:$0xff]
      %144 = vst [vmem:[#allocation8] sm:$0xff] %v140
      %145 = vst [vmem:[#allocation8 + $0x8] sm:$0xff] %v141
      %146 = vst [vmem:[#allocation8 + $0x10] sm:$0xff] %v142
      %147 = vst [vmem:[#allocation8 + $0x18] sm:$0xff] %v143
    $region25: #{tpu_custom_call.1} parent=1 // pred_fallthru
      _
    // Predicated region
    $region26: #{tpu_custom_call.1} parent=1 // pred_check
      _
    $region27: #{tpu_custom_call.1} parent=1 // pred_check_branch
      %149 = sbr.rel (0) target = $region29
    $region28: #{tpu_custom_call.1} parent=1 // pred_region
      %s151 = ssub.s32 512, 512
      %152 = vsyncadd [#allocation5], %s151
      %s153 = sshll.u32 [#allocation8], 4
      %s154 = int_to_ptr.vmem [resolvable:$true] %s153
      %159 = dma.vmem_to_hbm [thread:$0]  %s154, 512, %s2, [#allocation5], 128, 128, 8
    $region29: #{tpu_custom_call.1} parent=1 // pred_fallthru
      _
    // Predicated region
    $region30: #{tpu_custom_call.1} parent=1 // pred_check
      _
    $region31: #{tpu_custom_call.1} parent=1 // pred_check_branch
      %161 = sbr.rel (0) target = $region33
    $region32: #{tpu_custom_call.1} parent=1 // pred_region
      %162 = dma.done [#allocation5], 512
    $region33: #{tpu_custom_call.1} parent=1 // pred_fallthru
      _
    %163 = vsyncpa [#allocation4], 1
    %164 = vsyncpa [#allocation7], 1
    %165 = vsyncpa [#allocation5], 1

</llo_original>
